<compile_context>
chip_gen: v7x
topology: tpu7x:2x2x1
jax: 0.10.0
libtpu: 0.0.40
codegen_flags: <defaults>
</compile_context>

<pallas_src>
import functools

import jax
import jax.numpy as jnp
from jax import lax
from jax.experimental import pallas as pl
from jax.experimental.pallas import tpu as pltpu


def lstm_kernel(zx_ref, whh_ref, out_ref):
    """Single-invocation LSTM recurrence on the (single) surviving batch row.

    zx_ref:  (T, 4H)  precomputed x_t @ W_ih^T + (b_ih + b_hh), gate order [i,f,o,g]
    whh_ref: (H, 4H)  W_hh^T with the same [i,f,o,g] column order
    out_ref: (T, H)   hidden state h_t for every step (lane-dense output)
    """
    T = zx_ref.shape[0]
    H = whh_ref.shape[0]

    # W_hh^T is identical for all steps — keep it resident across the loop.
    whh = whh_ref[...]                                     # (H, 4H)

    h = jnp.zeros((1, H), jnp.float32)
    c = jnp.zeros((1, H), jnp.float32)

    hs = []
    for t in range(T):                                     # T static -> straight-line
        # Gate pre-activations: hoisted input projection + recurrent matmul.
        z = zx_ref[t:t + 1, :] + jnp.dot(h, whh,
                                         preferred_element_type=jnp.float32)  # (1, 4H)

        # Columns are pre-permuted to [i, f, o | g]: one EUP-friendly sigmoid
        # region (via tanh, no divide) and one tanh region per step.
        s = 0.5 * jnp.tanh(0.5 * z[:, :3 * H]) + 0.5       # sigmoid([i,f,o])
        i_g = s[:, 0 * H:1 * H]
        f_g = s[:, 1 * H:2 * H]
        o_g = s[:, 2 * H:3 * H]
        g_g = jnp.tanh(z[:, 3 * H:])                       # (1, H)

        c = f_g * c + i_g * g_g
        h = o_g * jnp.tanh(c)
        hs.append(h)

    # Single dense (T, H) store instead of T one-sublane masked stores.
    out_ref[...] = jnp.concatenate(hs, axis=0)


def _permute_gates(m, H, axis):
    """Reorder PyTorch gate blocks [i, f, g, o] -> [i, f, o, g] along `axis`."""
    i = lax.slice_in_dim(m, 0 * H, 1 * H, axis=axis)
    f = lax.slice_in_dim(m, 1 * H, 2 * H, axis=axis)
    g = lax.slice_in_dim(m, 2 * H, 3 * H, axis=axis)
    o = lax.slice_in_dim(m, 3 * H, 4 * H, axis=axis)
    return jnp.concatenate([i, f, o, g], axis=axis)


@functools.partial(jax.jit)
def lstm_model_forward(x, wih, whh, b_ih, b_hh, wfc, bfc):
    """x: (T, B, I) float32. Returns (T, O) float32 (O = 1)."""
    T, B, I = x.shape
    H = whh.shape[1]
    O = wfc.shape[0]

    # Fold the gate permutation into the weights/bias (O(weights), not O(T*B)).
    wih_p = _permute_gates(wih.astype(jnp.float32), H, axis=0)              # (4H, I)
    b_p = _permute_gates((b_ih + b_hh).astype(jnp.float32), H, axis=0)      # (4H,)
    whh_t_p = _permute_gates(whh.T.astype(jnp.float32), H, axis=1)          # (H, 4H)

    # `output[:, -1, :]` only ever reads the LAST BATCH element of the LSTM
    # output, and batch elements are independent -> drop the dead rows here.
    x_last = x[:, B - 1, :].astype(jnp.float32)                             # (T, I)

    # Hoisted input projection (one XLA matmul), already in [i,f,o,g] order.
    zx = x_last @ wih_p.T + b_p                                             # (T, 4H)

    hsel = pl.pallas_call(
        lstm_kernel,
        out_shape=jax.ShapeDtypeStruct((T, H), jnp.float32),
        grid_spec=pltpu.PrefetchScalarGridSpec(
            num_scalar_prefetch=0,
            grid=(1,),                                       # single invocation
            in_specs=[
                pl.BlockSpec((T, 4 * H), lambda i: (0, 0)),  # Zx (VMEM-resident)
                pl.BlockSpec((H, 4 * H), lambda i: (0, 0)),  # W_hh^T
            ],
            out_specs=pl.BlockSpec((T, H), lambda i: (0, 0)),
        ),
        compiler_params=pltpu.CompilerParams(
            dimension_semantics=("arbitrary",)),
    )(zx, whh_t_p)

    # Tiny (T,H)@(H,O) fc done in XLA so the kernel output stays lane-dense.
    return hsel @ wfc.T + bfc


def lstm_model_reference(x, wih, whh, b_ih, b_hh, wfc, bfc):
    """Pure-JAX reference mirroring PyTorch nn.LSTM + the module's forward."""
    T, B, I = x.shape
    H = whh.shape[1]
    h = jnp.zeros((B, H), jnp.float32)
    c = jnp.zeros((B, H), jnp.float32)
    outs = []
    for t in range(T):
        z = x[t] @ wih.T + h @ whh.T + b_ih + b_hh
        i_g = jax.nn.sigmoid(z[:, :H])
        f_g = jax.nn.sigmoid(z[:, H:2 * H])
        g_g = jnp.tanh(z[:, 2 * H:3 * H])
        o_g = jax.nn.sigmoid(z[:, 3 * H:])
        c = f_g * c + i_g * g_g
        h = o_g * jnp.tanh(c)
        outs.append(h)
    out = jnp.stack(outs)        # (T, B, H)
    sel = out[:, -1, :]          # (T, H) -- last *batch* element, as in the module
    return sel @ wfc.T + bfc


if __name__ == "__main__":
    input_size, hidden_size, output_size = 3, 32, 1
    T, B = 8, 4                  # seq len, batch

    key = jax.random.PRNGKey(0)
    k = 1.0 / jnp.sqrt(hidden_size)
    ks = jax.random.split(key, 7)
    # Deterministic uniform(-1/sqrt(H), 1/sqrt(H)) init (PyTorch default shapes).
    wih = jax.random.uniform(ks[0], (4 * hidden_size, input_size), jnp.float32, -k, k)
    whh = jax.random.uniform(ks[1], (4 * hidden_size, hidden_size), jnp.float32, -k, k)
    b_ih = jax.random.uniform(ks[2], (4 * hidden_size,), jnp.float32, -k, k)
    b_hh = jax.random.uniform(ks[3], (4 * hidden_size,), jnp.float32, -k, k)
    wfc = jax.random.uniform(ks[4], (output_size, hidden_size), jnp.float32, -k, k)
    bfc = jax.random.uniform(ks[5], (output_size,), jnp.float32, -k, k)

    x = jax.random.normal(ks[6], (T, B, input_size), jnp.float32)

    out = lstm_model_forward(x, wih, whh, b_ih, b_hh, wfc, bfc)
    out = jax.block_until_ready(out)

    ref = lstm_model_reference(x, wih, whh, b_ih, b_hh, wfc, bfc)
    assert out.shape == (T, output_size), out.shape
    assert jnp.allclose(out, ref, atol=2e-5, rtol=2e-5), (out, ref)

    print("KERNEL_OK")
</pallas_src>

<mosaic_0001>
module attributes {stable_mosaic.version = 11 : i64} {
  func.func @lstm_kernel(%arg0: i32, %arg1: memref<8x128xf32, #tpu.memory_space<vmem>>, %arg2: memref<32x128xf32, #tpu.memory_space<vmem>>, %arg3: memref<8x32xf32, #tpu.memory_space<vmem>>) attributes {dimension_semantics = [#tpu.dimension_semantics<arbitrary>], iteration_bounds = array<i64: 1>, scalar_prefetch = 0 : i64, scratch_operands = 0 : i64, tpu.core_type = #tpu.core_type<tc>, window_params = [{pipeline_mode = #tpu.pipeline_mode<synchronous>, transform_indices = @transform_0, window_bounds = array<i64: 8, 128>}, {pipeline_mode = #tpu.pipeline_mode<synchronous>, transform_indices = @transform_1, window_bounds = array<i64: 32, 128>}, {pipeline_mode = #tpu.pipeline_mode<synchronous>, transform_indices = @transform_2, window_bounds = array<i64: 8, 32>}]} {
    %c0 = arith.constant 0 : index
    %c0_0 = arith.constant 0 : index
    %0 = vector.load %arg2[%c0, %c0_0] : memref<32x128xf32, #tpu.memory_space<vmem>>, vector<32x128xf32>
    %cst = arith.constant 0.000000e+00 : f32
    %1 = vector.broadcast %cst : f32 to vector<1x32xf32>
    %cst_1 = arith.constant 0.000000e+00 : f32
    %2 = vector.broadcast %cst_1 : f32 to vector<1x32xf32>
    %c0_2 = arith.constant 0 : index
    %c0_3 = arith.constant 0 : index
    %3 = vector.load %arg1[%c0_2, %c0_3] : memref<8x128xf32, #tpu.memory_space<vmem>>, vector<1x128xf32>
    %cst_4 = arith.constant dense<0.000000e+00> : vector<1x128xf32>
    %4 = tpu.matmul %1, %0, %cst_4 {dimension_numbers = #tpu.dot_dimension_numbers<[1], [0], [0], [1], [0, 0, 1, 1], [], []>} : vector<1x32xf32>, vector<32x128xf32>, vector<1x128xf32> -> vector<1x128xf32>
    %5 = arith.addf %3, %4 : vector<1x128xf32>
    %6 = vector.extract_strided_slice %5 {offsets = [0, 0], sizes = [1, 96], strides = [1, 1]} : vector<1x128xf32> to vector<1x96xf32>
    %cst_5 = arith.constant 5.000000e-01 : f32
    %7 = vector.broadcast %cst_5 : f32 to vector<1x96xf32>
    %8 = arith.mulf %7, %6 : vector<1x96xf32>
    %9 = math.tanh %8 : vector<1x96xf32>
    %cst_6 = arith.constant 5.000000e-01 : f32
    %10 = vector.broadcast %cst_6 : f32 to vector<1x96xf32>
    %11 = arith.mulf %10, %9 : vector<1x96xf32>
    %cst_7 = arith.constant 5.000000e-01 : f32
    %12 = vector.broadcast %cst_7 : f32 to vector<1x96xf32>
    %13 = arith.addf %11, %12 : vector<1x96xf32>
    %14 = vector.extract_strided_slice %13 {offsets = [0, 0], sizes = [1, 32], strides = [1, 1]} : vector<1x96xf32> to vector<1x32xf32>
    %15 = vector.extract_strided_slice %13 {offsets = [0, 32], sizes = [1, 32], strides = [1, 1]} : vector<1x96xf32> to vector<1x32xf32>
    %16 = vector.extract_strided_slice %13 {offsets = [0, 64], sizes = [1, 32], strides = [1, 1]} : vector<1x96xf32> to vector<1x32xf32>
    %17 = vector.extract_strided_slice %5 {offsets = [0, 96], sizes = [1, 32], strides = [1, 1]} : vector<1x128xf32> to vector<1x32xf32>
    %18 = math.tanh %17 : vector<1x32xf32>
    %19 = arith.mulf %15, %2 : vector<1x32xf32>
    %20 = arith.mulf %14, %18 : vector<1x32xf32>
    %21 = arith.addf %19, %20 : vector<1x32xf32>
    %22 = math.tanh %21 : vector<1x32xf32>
    %23 = arith.mulf %16, %22 : vector<1x32xf32>
    %c1 = arith.constant 1 : index
    %c0_8 = arith.constant 0 : index
    %24 = vector.load %arg1[%c1, %c0_8] : memref<8x128xf32, #tpu.memory_space<vmem>>, vector<1x128xf32>
    %cst_9 = arith.constant dense<0.000000e+00> : vector<1x128xf32>
    %25 = tpu.matmul %23, %0, %cst_9 {dimension_numbers = #tpu.dot_dimension_numbers<[1], [0], [0], [1], [0, 0, 1, 1], [], []>} : vector<1x32xf32>, vector<32x128xf32>, vector<1x128xf32> -> vector<1x128xf32>
    %26 = arith.addf %24, %25 : vector<1x128xf32>
    %27 = vector.extract_strided_slice %26 {offsets = [0, 0], sizes = [1, 96], strides = [1, 1]} : vector<1x128xf32> to vector<1x96xf32>
    %cst_10 = arith.constant 5.000000e-01 : f32
    %28 = vector.broadcast %cst_10 : f32 to vector<1x96xf32>
    %29 = arith.mulf %28, %27 : vector<1x96xf32>
    %30 = math.tanh %29 : vector<1x96xf32>
    %cst_11 = arith.constant 5.000000e-01 : f32
    %31 = vector.broadcast %cst_11 : f32 to vector<1x96xf32>
    %32 = arith.mulf %31, %30 : vector<1x96xf32>
    %cst_12 = arith.constant 5.000000e-01 : f32
    %33 = vector.broadcast %cst_12 : f32 to vector<1x96xf32>
    %34 = arith.addf %32, %33 : vector<1x96xf32>
    %35 = vector.extract_strided_slice %34 {offsets = [0, 0], sizes = [1, 32], strides = [1, 1]} : vector<1x96xf32> to vector<1x32xf32>
    %36 = vector.extract_strided_slice %34 {offsets = [0, 32], sizes = [1, 32], strides = [1, 1]} : vector<1x96xf32> to vector<1x32xf32>
    %37 = vector.extract_strided_slice %34 {offsets = [0, 64], sizes = [1, 32], strides = [1, 1]} : vector<1x96xf32> to vector<1x32xf32>
    %38 = vector.extract_strided_slice %26 {offsets = [0, 96], sizes = [1, 32], strides = [1, 1]} : vector<1x128xf32> to vector<1x32xf32>
    %39 = math.tanh %38 : vector<1x32xf32>
    %40 = arith.mulf %36, %21 : vector<1x32xf32>
    %41 = arith.mulf %35, %39 : vector<1x32xf32>
    %42 = arith.addf %40, %41 : vector<1x32xf32>
    %43 = math.tanh %42 : vector<1x32xf32>
    %44 = arith.mulf %37, %43 : vector<1x32xf32>
    %c2 = arith.constant 2 : index
    %c0_13 = arith.constant 0 : index
    %45 = vector.load %arg1[%c2, %c0_13] : memref<8x128xf32, #tpu.memory_space<vmem>>, vector<1x128xf32>
    %cst_14 = arith.constant dense<0.000000e+00> : vector<1x128xf32>
    %46 = tpu.matmul %44, %0, %cst_14 {dimension_numbers = #tpu.dot_dimension_numbers<[1], [0], [0], [1], [0, 0, 1, 1], [], []>} : vector<1x32xf32>, vector<32x128xf32>, vector<1x128xf32> -> vector<1x128xf32>
    %47 = arith.addf %45, %46 : vector<1x128xf32>
    %48 = vector.extract_strided_slice %47 {offsets = [0, 0], sizes = [1, 96], strides = [1, 1]} : vector<1x128xf32> to vector<1x96xf32>
    %cst_15 = arith.constant 5.000000e-01 : f32
    %49 = vector.broadcast %cst_15 : f32 to vector<1x96xf32>
    %50 = arith.mulf %49, %48 : vector<1x96xf32>
    %51 = math.tanh %50 : vector<1x96xf32>
    %cst_16 = arith.constant 5.000000e-01 : f32
    %52 = vector.broadcast %cst_16 : f32 to vector<1x96xf32>
    %53 = arith.mulf %52, %51 : vector<1x96xf32>
    %cst_17 = arith.constant 5.000000e-01 : f32
    %54 = vector.broadcast %cst_17 : f32 to vector<1x96xf32>
    %55 = arith.addf %53, %54 : vector<1x96xf32>
    %56 = vector.extract_strided_slice %55 {offsets = [0, 0], sizes = [1, 32], strides = [1, 1]} : vector<1x96xf32> to vector<1x32xf32>
    %57 = vector.extract_strided_slice %55 {offsets = [0, 32], sizes = [1, 32], strides = [1, 1]} : vector<1x96xf32> to vector<1x32xf32>
    %58 = vector.extract_strided_slice %55 {offsets = [0, 64], sizes = [1, 32], strides = [1, 1]} : vector<1x96xf32> to vector<1x32xf32>
    %59 = vector.extract_strided_slice %47 {offsets = [0, 96], sizes = [1, 32], strides = [1, 1]} : vector<1x128xf32> to vector<1x32xf32>
    %60 = math.tanh %59 : vector<1x32xf32>
    %61 = arith.mulf %57, %42 : vector<1x32xf32>
    %62 = arith.mulf %56, %60 : vector<1x32xf32>
    %63 = arith.addf %61, %62 : vector<1x32xf32>
    %64 = math.tanh %63 : vector<1x32xf32>
    %65 = arith.mulf %58, %64 : vector<1x32xf32>
    %c3 = arith.constant 3 : index
    %c0_18 = arith.constant 0 : index
    %66 = vector.load %arg1[%c3, %c0_18] : memref<8x128xf32, #tpu.memory_space<vmem>>, vector<1x128xf32>
    %cst_19 = arith.constant dense<0.000000e+00> : vector<1x128xf32>
    %67 = tpu.matmul %65, %0, %cst_19 {dimension_numbers = #tpu.dot_dimension_numbers<[1], [0], [0], [1], [0, 0, 1, 1], [], []>} : vector<1x32xf32>, vector<32x128xf32>, vector<1x128xf32> -> vector<1x128xf32>
    %68 = arith.addf %66, %67 : vector<1x128xf32>
    %69 = vector.extract_strided_slice %68 {offsets = [0, 0], sizes = [1, 96], strides = [1, 1]} : vector<1x128xf32> to vector<1x96xf32>
    %cst_20 = arith.constant 5.000000e-01 : f32
    %70 = vector.broadcast %cst_20 : f32 to vector<1x96xf32>
    %71 = arith.mulf %70, %69 : vector<1x96xf32>
    %72 = math.tanh %71 : vector<1x96xf32>
    %cst_21 = arith.constant 5.000000e-01 : f32
    %73 = vector.broadcast %cst_21 : f32 to vector<1x96xf32>
    %74 = arith.mulf %73, %72 : vector<1x96xf32>
    %cst_22 = arith.constant 5.000000e-01 : f32
    %75 = vector.broadcast %cst_22 : f32 to vector<1x96xf32>
    %76 = arith.addf %74, %75 : vector<1x96xf32>
    %77 = vector.extract_strided_slice %76 {offsets = [0, 0], sizes = [1, 32], strides = [1, 1]} : vector<1x96xf32> to vector<1x32xf32>
    %78 = vector.extract_strided_slice %76 {offsets = [0, 32], sizes = [1, 32], strides = [1, 1]} : vector<1x96xf32> to vector<1x32xf32>
    %79 = vector.extract_strided_slice %76 {offsets = [0, 64], sizes = [1, 32], strides = [1, 1]} : vector<1x96xf32> to vector<1x32xf32>
    %80 = vector.extract_strided_slice %68 {offsets = [0, 96], sizes = [1, 32], strides = [1, 1]} : vector<1x128xf32> to vector<1x32xf32>
    %81 = math.tanh %80 : vector<1x32xf32>
    %82 = arith.mulf %78, %63 : vector<1x32xf32>
    %83 = arith.mulf %77, %81 : vector<1x32xf32>
    %84 = arith.addf %82, %83 : vector<1x32xf32>
    %85 = math.tanh %84 : vector<1x32xf32>
    %86 = arith.mulf %79, %85 : vector<1x32xf32>
    %c4 = arith.constant 4 : index
    %c0_23 = arith.constant 0 : index
    %87 = vector.load %arg1[%c4, %c0_23] : memref<8x128xf32, #tpu.memory_space<vmem>>, vector<1x128xf32>
    %cst_24 = arith.constant dense<0.000000e+00> : vector<1x128xf32>
    %88 = tpu.matmul %86, %0, %cst_24 {dimension_numbers = #tpu.dot_dimension_numbers<[1], [0], [0], [1], [0, 0, 1, 1], [], []>} : vector<1x32xf32>, vector<32x128xf32>, vector<1x128xf32> -> vector<1x128xf32>
    %89 = arith.addf %87, %88 : vector<1x128xf32>
    %90 = vector.extract_strided_slice %89 {offsets = [0, 0], sizes = [1, 96], strides = [1, 1]} : vector<1x128xf32> to vector<1x96xf32>
    %cst_25 = arith.constant 5.000000e-01 : f32
    %91 = vector.broadcast %cst_25 : f32 to vector<1x96xf32>
    %92 = arith.mulf %91, %90 : vector<1x96xf32>
    %93 = math.tanh %92 : vector<1x96xf32>
    %cst_26 = arith.constant 5.000000e-01 : f32
    %94 = vector.broadcast %cst_26 : f32 to vector<1x96xf32>
    %95 = arith.mulf %94, %93 : vector<1x96xf32>
    %cst_27 = arith.constant 5.000000e-01 : f32
    %96 = vector.broadcast %cst_27 : f32 to vector<1x96xf32>
    %97 = arith.addf %95, %96 : vector<1x96xf32>
    %98 = vector.extract_strided_slice %97 {offsets = [0, 0], sizes = [1, 32], strides = [1, 1]} : vector<1x96xf32> to vector<1x32xf32>
    %99 = vector.extract_strided_slice %97 {offsets = [0, 32], sizes = [1, 32], strides = [1, 1]} : vector<1x96xf32> to vector<1x32xf32>
    %100 = vector.extract_strided_slice %97 {offsets = [0, 64], sizes = [1, 32], strides = [1, 1]} : vector<1x96xf32> to vector<1x32xf32>
    %101 = vector.extract_strided_slice %89 {offsets = [0, 96], sizes = [1, 32], strides = [1, 1]} : vector<1x128xf32> to vector<1x32xf32>
    %102 = math.tanh %101 : vector<1x32xf32>
    %103 = arith.mulf %99, %84 : vector<1x32xf32>
    %104 = arith.mulf %98, %102 : vector<1x32xf32>
    %105 = arith.addf %103, %104 : vector<1x32xf32>
    %106 = math.tanh %105 : vector<1x32xf32>
    %107 = arith.mulf %100, %106 : vector<1x32xf32>
    %c5 = arith.constant 5 : index
    %c0_28 = arith.constant 0 : index
    %108 = vector.load %arg1[%c5, %c0_28] : memref<8x128xf32, #tpu.memory_space<vmem>>, vector<1x128xf32>
    %cst_29 = arith.constant dense<0.000000e+00> : vector<1x128xf32>
    %109 = tpu.matmul %107, %0, %cst_29 {dimension_numbers = #tpu.dot_dimension_numbers<[1], [0], [0], [1], [0, 0, 1, 1], [], []>} : vector<1x32xf32>, vector<32x128xf32>, vector<1x128xf32> -> vector<1x128xf32>
    %110 = arith.addf %108, %109 : vector<1x128xf32>
    %111 = vector.extract_strided_slice %110 {offsets = [0, 0], sizes = [1, 96], strides = [1, 1]} : vector<1x128xf32> to vector<1x96xf32>
    %cst_30 = arith.constant 5.000000e-01 : f32
    %112 = vector.broadcast %cst_30 : f32 to vector<1x96xf32>
    %113 = arith.mulf %112, %111 : vector<1x96xf32>
    %114 = math.tanh %113 : vector<1x96xf32>
    %cst_31 = arith.constant 5.000000e-01 : f32
    %115 = vector.broadcast %cst_31 : f32 to vector<1x96xf32>
    %116 = arith.mulf %115, %114 : vector<1x96xf32>
    %cst_32 = arith.constant 5.000000e-01 : f32
    %117 = vector.broadcast %cst_32 : f32 to vector<1x96xf32>
    %118 = arith.addf %116, %117 : vector<1x96xf32>
    %119 = vector.extract_strided_slice %118 {offsets = [0, 0], sizes = [1, 32], strides = [1, 1]} : vector<1x96xf32> to vector<1x32xf32>
    %120 = vector.extract_strided_slice %118 {offsets = [0, 32], sizes = [1, 32], strides = [1, 1]} : vector<1x96xf32> to vector<1x32xf32>
    %121 = vector.extract_strided_slice %118 {offsets = [0, 64], sizes = [1, 32], strides = [1, 1]} : vector<1x96xf32> to vector<1x32xf32>
    %122 = vector.extract_strided_slice %110 {offsets = [0, 96], sizes = [1, 32], strides = [1, 1]} : vector<1x128xf32> to vector<1x32xf32>
    %123 = math.tanh %122 : vector<1x32xf32>
    %124 = arith.mulf %120, %105 : vector<1x32xf32>
    %125 = arith.mulf %119, %123 : vector<1x32xf32>
    %126 = arith.addf %124, %125 : vector<1x32xf32>
    %127 = math.tanh %126 : vector<1x32xf32>
    %128 = arith.mulf %121, %127 : vector<1x32xf32>
    %c6 = arith.constant 6 : index
    %c0_33 = arith.constant 0 : index
    %129 = vector.load %arg1[%c6, %c0_33] : memref<8x128xf32, #tpu.memory_space<vmem>>, vector<1x128xf32>
    %cst_34 = arith.constant dense<0.000000e+00> : vector<1x128xf32>
    %130 = tpu.matmul %128, %0, %cst_34 {dimension_numbers = #tpu.dot_dimension_numbers<[1], [0], [0], [1], [0, 0, 1, 1], [], []>} : vector<1x32xf32>, vector<32x128xf32>, vector<1x128xf32> -> vector<1x128xf32>
    %131 = arith.addf %129, %130 : vector<1x128xf32>
    %132 = vector.extract_strided_slice %131 {offsets = [0, 0], sizes = [1, 96], strides = [1, 1]} : vector<1x128xf32> to vector<1x96xf32>
    %cst_35 = arith.constant 5.000000e-01 : f32
    %133 = vector.broadcast %cst_35 : f32 to vector<1x96xf32>
    %134 = arith.mulf %133, %132 : vector<1x96xf32>
    %135 = math.tanh %134 : vector<1x96xf32>
    %cst_36 = arith.constant 5.000000e-01 : f32
    %136 = vector.broadcast %cst_36 : f32 to vector<1x96xf32>
    %137 = arith.mulf %136, %135 : vector<1x96xf32>
    %cst_37 = arith.constant 5.000000e-01 : f32
    %138 = vector.broadcast %cst_37 : f32 to vector<1x96xf32>
    %139 = arith.addf %137, %138 : vector<1x96xf32>
    %140 = vector.extract_strided_slice %139 {offsets = [0, 0], sizes = [1, 32], strides = [1, 1]} : vector<1x96xf32> to vector<1x32xf32>
    %141 = vector.extract_strided_slice %139 {offsets = [0, 32], sizes = [1, 32], strides = [1, 1]} : vector<1x96xf32> to vector<1x32xf32>
    %142 = vector.extract_strided_slice %139 {offsets = [0, 64], sizes = [1, 32], strides = [1, 1]} : vector<1x96xf32> to vector<1x32xf32>
    %143 = vector.extract_strided_slice %131 {offsets = [0, 96], sizes = [1, 32], strides = [1, 1]} : vector<1x128xf32> to vector<1x32xf32>
    %144 = math.tanh %143 : vector<1x32xf32>
    %145 = arith.mulf %141, %126 : vector<1x32xf32>
    %146 = arith.mulf %140, %144 : vector<1x32xf32>
    %147 = arith.addf %145, %146 : vector<1x32xf32>
    %148 = math.tanh %147 : vector<1x32xf32>
    %149 = arith.mulf %142, %148 : vector<1x32xf32>
    %c7 = arith.constant 7 : index
    %c0_38 = arith.constant 0 : index
    %150 = vector.load %arg1[%c7, %c0_38] : memref<8x128xf32, #tpu.memory_space<vmem>>, vector<1x128xf32>
    %cst_39 = arith.constant dense<0.000000e+00> : vector<1x128xf32>
    %151 = tpu.matmul %149, %0, %cst_39 {dimension_numbers = #tpu.dot_dimension_numbers<[1], [0], [0], [1], [0, 0, 1, 1], [], []>} : vector<1x32xf32>, vector<32x128xf32>, vector<1x128xf32> -> vector<1x128xf32>
    %152 = arith.addf %150, %151 : vector<1x128xf32>
    %153 = vector.extract_strided_slice %152 {offsets = [0, 0], sizes = [1, 96], strides = [1, 1]} : vector<1x128xf32> to vector<1x96xf32>
    %cst_40 = arith.constant 5.000000e-01 : f32
    %154 = vector.broadcast %cst_40 : f32 to vector<1x96xf32>
    %155 = arith.mulf %154, %153 : vector<1x96xf32>
    %156 = math.tanh %155 : vector<1x96xf32>
    %cst_41 = arith.constant 5.000000e-01 : f32
    %157 = vector.broadcast %cst_41 : f32 to vector<1x96xf32>
    %158 = arith.mulf %157, %156 : vector<1x96xf32>
    %cst_42 = arith.constant 5.000000e-01 : f32
    %159 = vector.broadcast %cst_42 : f32 to vector<1x96xf32>
    %160 = arith.addf %158, %159 : vector<1x96xf32>
    %161 = vector.extract_strided_slice %160 {offsets = [0, 0], sizes = [1, 32], strides = [1, 1]} : vector<1x96xf32> to vector<1x32xf32>
    %162 = vector.extract_strided_slice %160 {offsets = [0, 32], sizes = [1, 32], strides = [1, 1]} : vector<1x96xf32> to vector<1x32xf32>
    %163 = vector.extract_strided_slice %160 {offsets = [0, 64], sizes = [1, 32], strides = [1, 1]} : vector<1x96xf32> to vector<1x32xf32>
    %164 = vector.extract_strided_slice %152 {offsets = [0, 96], sizes = [1, 32], strides = [1, 1]} : vector<1x128xf32> to vector<1x32xf32>
    %165 = math.tanh %164 : vector<1x32xf32>
    %166 = arith.mulf %162, %147 : vector<1x32xf32>
    %167 = arith.mulf %161, %165 : vector<1x32xf32>
    %168 = arith.addf %166, %167 : vector<1x32xf32>
    %169 = math.tanh %168 : vector<1x32xf32>
    %170 = arith.mulf %163, %169 : vector<1x32xf32>
    %171 = tpu.concatenate %23, %44, %65, %86, %107, %128, %149, %170 in 0 : vector<1x32xf32>, vector<1x32xf32>, vector<1x32xf32>, vector<1x32xf32>, vector<1x32xf32>, vector<1x32xf32>, vector<1x32xf32>, vector<1x32xf32> -> vector<8x32xf32>
    %c0_43 = arith.constant 0 : index
    %c0_44 = arith.constant 0 : index
    %172 = vector.load %arg3[%c0_43, %c0_44] : memref<8x32xf32, #tpu.memory_space<vmem>>, vector<8x32xf32>
    tpu.vector_store %arg3[%c0_43, %c0_44], %171 {strides = array<i32>} : memref<8x32xf32, #tpu.memory_space<vmem>>, vector<8x32xf32>,
    return
  }
  func.func @transform_0(%arg0: i32) -> (i32, i32) {
    %c0_i32 = arith.constant 0 : i32
    %c0_i32_0 = arith.constant 0 : i32
    %c0_i32_1 = arith.constant 0 : i32
    return %c0_i32, %c0_i32_0 : i32, i32
  }
  func.func @transform_1(%arg0: i32) -> (i32, i32) {
    %c0_i32 = arith.constant 0 : i32
    %c0_i32_0 = arith.constant 0 : i32
    %c0_i32_1 = arith.constant 0 : i32
    return %c0_i32, %c0_i32_0 : i32, i32
  }
  func.func @transform_2(%arg0: i32) -> (i32, i32) {
    %c0_i32 = arith.constant 0 : i32
    %c0_i32_0 = arith.constant 0 : i32
    %c0_i32_1 = arith.constant 0 : i32
    return %c0_i32, %c0_i32_0 : i32, i32
  }
}

</mosaic_0001>

<llo_original>
// kernel: lstm_model_forward.1
$region0: #{lstm_model_forward.1}
  #allocation0 [shape = 'u32[]', space=smem, size = 0x4, offset = 0x4, fixed_abs, tag = 'smem constant byte address 0x4 - core index']
  #allocation1 [shape = 'u32[144,128]{1,0:T(1,128)}', space=vmem, size = 0x12000, scoped, tag = 'internal scratch']
  %s0 = inlined_call_operand.vmem [shape: f32[8,128], index: 0, kind: input, shape index: {}]
  %s1 = inlined_call_operand.vmem [shape: f32[32,128], index: 1, kind: input, shape index: {}]
  %s2 = inlined_call_operand.vmem [shape: f32[8,32], index: 2, kind: output, shape index: {}]
  %s3 = sld [smem:[#allocation0]]
  $region18: #{lstm_model_forward.1} parent=0
    _
  %s5 = ssub.s32 1, %s3
  %s6 = scalar_select 0, %s5, %s3
  // Predicated region
  $region2: #{lstm_model_forward.1} parent=0 // pred_check
    _
  $region3: #{lstm_model_forward.1} parent=0 // pred_check_branch
    %8 = sbr.rel (0) target = $region5
  $region4: #{lstm_model_forward.1} parent=0 // pred_region
    _
  $region5: #{lstm_model_forward.1} parent=0 // pred_fallthru
    _
  // Predicated region
  $region6: #{lstm_model_forward.1} parent=0 // pred_check
    _
  $region7: #{lstm_model_forward.1} parent=0 // pred_check_branch
    %10 = sbr.rel (0) target = $region9
  $region8: #{lstm_model_forward.1} parent=0 // pred_region
    _
  $region9: #{lstm_model_forward.1} parent=0 // pred_fallthru
    _
  %v11 = vld [vmem:[%s1] sm:$0xff]
  %v12 = vld [vmem:[%s1 + $0x8] sm:$0xff]
  %v13 = vld [vmem:[%s1 + $0x10] sm:$0xff]
  %v14 = vld [vmem:[%s1 + $0x18] sm:$0xff]
  %v15 = vld [vmem:[%s0] sm:$0x1]
  %vm16 = vcmask 261120
  %v18 = vsel %vm16, 0.0, 0
  %20 = vmatprep.subr.mxu0 0.0
  %21 = vmatpush1.msra.mxu0 %v11
  %22 = vmatprep.subr.mxu0 0.0
  %23 = vmatpush1.msra.mxu0 %v12
  %24 = vmatprep.subr.mxu0 0.0
  %25 = vmatpush1.msra.mxu0 %v13
  %26 = vmatprep.subr.mxu0 0.0
  %27 = vmatpush1.msra.mxu0 %v14
  %28 = vmatprep.subr.mxu0 0.0
  %29 = vmatpush1.msra.mxu0 0.0
  %30 = vmatprep.subr.mxu0 0.0
  %31 = vmatpush1.msra.mxu0 0.0
  %32 = vmatprep.subr.mxu0 0.0
  %33 = vmatpush1.msra.mxu0 0.0
  %34 = vmatprep.subr.mxu0 0.0
  %35 = vmatpush1.msra.mxu0 0.0
  %36 = vmatprep.subr.mxu0 0.0
  %37 = vmatpush1.msra.mxu0 0.0
  %38 = vmatprep.subr.mxu0 0.0
  %39 = vmatpush1.msra.mxu0 0.0
  %40 = vmatprep.subr.mxu0 0.0
  %41 = vmatpush1.msra.mxu0 0.0
  %42 = vmatprep.subr.mxu0 0.0
  %43 = vmatpush1.msra.mxu0 0.0
  %44 = vmatprep.subr.mxu0 0.0
  %45 = vmatpush1.msra.mxu0 0.0
  %46 = vmatprep.subr.mxu0 0.0
  %47 = vmatpush1.msra.mxu0 0.0
  %48 = vmatprep.subr.mxu0 0.0
  %49 = vmatpush1.msra.mxu0 0.0
  %50 = vmatprep.subr.mxu0 0.0
  %51 = vmatpush1.msra.mxu0 0.0
  %52 = vmatprep.subr.mxu0 0.0
  %53 = vmatpush1.msra.mxu0 0.0
  %54 = vmatprep.subr.mxu0 0.0
  %55 = vmatpush1.msra.mxu0 0.0
  %56 = vmatprep.subr.mxu0 0.0
  %57 = vmatpush1.msra.mxu0 0.0
  %58 = vmatprep.subr.mxu0 0.0
  %59 = vmatpush1.msra.mxu0 0.0
  %60 = vmatprep.subr.mxu0 0.0
  %61 = vmatpush1.msra.mxu0 0.0
  %62 = vmatprep.subr.mxu0 0.0
  %63 = vmatpush1.msra.mxu0 0.0
  %64 = vmatprep.subr.mxu0 0.0
  %65 = vmatpush1.msra.mxu0 0.0
  %66 = vmatprep.subr.mxu0 0.0
  %67 = vmatpush1.msra.mxu0 0.0
  %68 = vmatprep.subr.mxu0 0.0
  %69 = vmatpush1.msra.mxu0 0.0
  %70 = vmatprep.subr.mxu0 0.0
  %71 = vmatpush1.msra.mxu0 0.0
  %72 = vmatprep.subr.mxu0 0.0
  %73 = vmatpush1.msra.mxu0 0.0
  %74 = vmatprep.subr.mxu0 0.0
  %75 = vmatpush1.msra.mxu0 0.0
  %76 = vmatprep.subr.mxu0 0.0
  %77 = vmatpush1.msra.mxu0 0.0
  %78 = vmatprep.subr.mxu0 0.0
  %79 = vmatpush1.msra.mxu0 0.0
  %80 = vmatprep.subr.mxu0 0.0
  %81 = vmatpush1.msra.mxu0 0.0
  %82 = vmatprep.subr.mxu0 0.0
  %83 = vmatpush1.msra.mxu0 0.0
  %84 = vmatprep.mubr.f32.mxu0 0.0
  %85 = vmatmul.mubr.f32.gmra.mrb[0].mxu0 %v18
  %v86 = vpop.f32.mrb[0].mxu0
  %v87 = vadd.f32 0.0, %v86
  %v88 = vpop.f32.mrb[0].mxu0
  %89 = vdwg.mxu0
  %v90 = vadd.f32 %v15, %v87
  %v91 = vmul.f32 %v90, 0.5
  %v92 = vtanh.pop %v91
  %v93 = vmul.f32 %v92, 0.5
  %v94 = vadd.f32 %v93, 0.5
  %v95 = vtanh.pop %v90
  %v96 = vmul.f32 %v94, 0.0
  %98 = vrot.lane.b32.xlu0 %v95, 32
  %v99 = vpop.permute.xlu0 %98
  %v101 = vmul.f32 %v94, %v99
  %103 = vrot.lane.b32.xlu0 %v101, 32
  %v104 = vpop.permute.xlu0 %103
  %v106 = vadd.f32 %v96, %v104
  %v107 = vtanh.pop %v106
  %109 = vrot.lane.b32.xlu0 %v107, 32
  %v110 = vpop.permute.xlu0 %109
  %v112 = vmul.f32 %v94, %v110
  %v113 = vld [vmem:[%s0 + $0x1] sm:$0x1]
  %115 = vrot.lane.b32.xlu0 %v112, 64
  %v116 = vpop.permute.xlu0 %115
  %v117 = vsel %vm16, %v116, 0
  %119 = vmatprep.subr.mxu0 0.0
  %120 = vmatpush1.msra.mxu0 %v11
  %121 = vmatprep.subr.mxu0 0.0
  %122 = vmatpush1.msra.mxu0 %v12
  %123 = vmatprep.subr.mxu0 0.0
  %124 = vmatpush1.msra.mxu0 %v13
  %125 = vmatprep.subr.mxu0 0.0
  %126 = vmatpush1.msra.mxu0 %v14
  %127 = vmatprep.subr.mxu0 0.0
  %128 = vmatpush1.msra.mxu0 0.0
  %129 = vmatprep.subr.mxu0 0.0
  %130 = vmatpush1.msra.mxu0 0.0
  %131 = vmatprep.subr.mxu0 0.0
  %132 = vmatpush1.msra.mxu0 0.0
  %133 = vmatprep.subr.mxu0 0.0
  %134 = vmatpush1.msra.mxu0 0.0
  %135 = vmatprep.subr.mxu0 0.0
  %136 = vmatpush1.msra.mxu0 0.0
  %137 = vmatprep.subr.mxu0 0.0
  %138 = vmatpush1.msra.mxu0 0.0
  %139 = vmatprep.subr.mxu0 0.0
  %140 = vmatpush1.msra.mxu0 0.0
  %141 = vmatprep.subr.mxu0 0.0
  %142 = vmatpush1.msra.mxu0 0.0
  %143 = vmatprep.subr.mxu0 0.0
  %144 = vmatpush1.msra.mxu0 0.0
  %145 = vmatprep.subr.mxu0 0.0
  %146 = vmatpush1.msra.mxu0 0.0
  %147 = vmatprep.subr.mxu0 0.0
  %148 = vmatpush1.msra.mxu0 0.0
  %149 = vmatprep.subr.mxu0 0.0
  %150 = vmatpush1.msra.mxu0 0.0
  %151 = vmatprep.subr.mxu0 0.0
  %152 = vmatpush1.msra.mxu0 0.0
  %153 = vmatprep.subr.mxu0 0.0
  %154 = vmatpush1.msra.mxu0 0.0
  %155 = vmatprep.subr.mxu0 0.0
  %156 = vmatpush1.msra.mxu0 0.0
  %157 = vmatprep.subr.mxu0 0.0
  %158 = vmatpush1.msra.mxu0 0.0
  %159 = vmatprep.subr.mxu0 0.0
  %160 = vmatpush1.msra.mxu0 0.0
  %161 = vmatprep.subr.mxu0 0.0
  %162 = vmatpush1.msra.mxu0 0.0
  %163 = vmatprep.subr.mxu0 0.0
  %164 = vmatpush1.msra.mxu0 0.0
  %165 = vmatprep.subr.mxu0 0.0
  %166 = vmatpush1.msra.mxu0 0.0
  %167 = vmatprep.subr.mxu0 0.0
  %168 = vmatpush1.msra.mxu0 0.0
  %169 = vmatprep.subr.mxu0 0.0
  %170 = vmatpush1.msra.mxu0 0.0
  %171 = vmatprep.subr.mxu0 0.0
  %172 = vmatpush1.msra.mxu0 0.0
  %173 = vmatprep.subr.mxu0 0.0
  %174 = vmatpush1.msra.mxu0 0.0
  %175 = vmatprep.subr.mxu0 0.0
  %176 = vmatpush1.msra.mxu0 0.0
  %177 = vmatprep.subr.mxu0 0.0
  %178 = vmatpush1.msra.mxu0 0.0
  %179 = vmatprep.subr.mxu0 0.0
  %180 = vmatpush1.msra.mxu0 0.0
  %181 = vmatprep.subr.mxu0 0.0
  %182 = vmatpush1.msra.mxu0 0.0
  %183 = vmatprep.mubr.f32.mxu0 0.0
  %184 = vmatmul.mubr.f32.gmra.mrb[0].mxu0 %v117
  %v185 = vpop.f32.mrb[0].mxu0
  %v186 = vadd.f32 0.0, %v185
  %v187 = vpop.f32.mrb[0].mxu0
  %188 = vdwg.mxu0
  %v189 = vadd.f32 %v113, %v186
  %v190 = vmul.f32 %v189, 0.5
  %v191 = vtanh.pop %v190
  %v192 = vmul.f32 %v191, 0.5
  %v193 = vadd.f32 %v192, 0.5
  %v194 = vtanh.pop %v189
  %v195 = vmul.f32 %v193, %v106
  %197 = vrot.lane.b32.xlu0 %v194, 32
  %v198 = vpop.permute.xlu0 %197
  %v200 = vmul.f32 %v193, %v198
  %202 = vrot.lane.b32.xlu0 %v200, 32
  %v203 = vpop.permute.xlu0 %202
  %v205 = vadd.f32 %v195, %v203
  %v206 = vtanh.pop %v205
  %208 = vrot.lane.b32.xlu0 %v206, 32
  %v209 = vpop.permute.xlu0 %208
  %v211 = vmul.f32 %v193, %v209
  %v212 = vld [vmem:[%s0 + $0x2] sm:$0x1]
  %214 = vrot.lane.b32.xlu0 %v211, 64
  %v215 = vpop.permute.xlu0 %214
  %v216 = vsel %vm16, %v215, 0
  %218 = vmatprep.subr.mxu0 0.0
  %219 = vmatpush1.msra.mxu0 %v11
  %220 = vmatprep.subr.mxu0 0.0
  %221 = vmatpush1.msra.mxu0 %v12
  %222 = vmatprep.subr.mxu0 0.0
  %223 = vmatpush1.msra.mxu0 %v13
  %224 = vmatprep.subr.mxu0 0.0
  %225 = vmatpush1.msra.mxu0 %v14
  %226 = vmatprep.subr.mxu0 0.0
  %227 = vmatpush1.msra.mxu0 0.0
  %228 = vmatprep.subr.mxu0 0.0
  %229 = vmatpush1.msra.mxu0 0.0
  %230 = vmatprep.subr.mxu0 0.0
  %231 = vmatpush1.msra.mxu0 0.0
  %232 = vmatprep.subr.mxu0 0.0
  %233 = vmatpush1.msra.mxu0 0.0
  %234 = vmatprep.subr.mxu0 0.0
  %235 = vmatpush1.msra.mxu0 0.0
  %236 = vmatprep.subr.mxu0 0.0
  %237 = vmatpush1.msra.mxu0 0.0
  %238 = vmatprep.subr.mxu0 0.0
  %239 = vmatpush1.msra.mxu0 0.0
  %240 = vmatprep.subr.mxu0 0.0
  %241 = vmatpush1.msra.mxu0 0.0
  %242 = vmatprep.subr.mxu0 0.0
  %243 = vmatpush1.msra.mxu0 0.0
  %244 = vmatprep.subr.mxu0 0.0
  %245 = vmatpush1.msra.mxu0 0.0
  %246 = vmatprep.subr.mxu0 0.0
  %247 = vmatpush1.msra.mxu0 0.0
  %248 = vmatprep.subr.mxu0 0.0
  %249 = vmatpush1.msra.mxu0 0.0
  %250 = vmatprep.subr.mxu0 0.0
  %251 = vmatpush1.msra.mxu0 0.0
  %252 = vmatprep.subr.mxu0 0.0
  %253 = vmatpush1.msra.mxu0 0.0
  %254 = vmatprep.subr.mxu0 0.0
  %255 = vmatpush1.msra.mxu0 0.0
  %256 = vmatprep.subr.mxu0 0.0
  %257 = vmatpush1.msra.mxu0 0.0
  %258 = vmatprep.subr.mxu0 0.0
  %259 = vmatpush1.msra.mxu0 0.0
  %260 = vmatprep.subr.mxu0 0.0
  %261 = vmatpush1.msra.mxu0 0.0
  %262 = vmatprep.subr.mxu0 0.0
  %263 = vmatpush1.msra.mxu0 0.0
  %264 = vmatprep.subr.mxu0 0.0
  %265 = vmatpush1.msra.mxu0 0.0
  %266 = vmatprep.subr.mxu0 0.0
  %267 = vmatpush1.msra.mxu0 0.0
  %268 = vmatprep.subr.mxu0 0.0
  %269 = vmatpush1.msra.mxu0 0.0
  %270 = vmatprep.subr.mxu0 0.0
  %271 = vmatpush1.msra.mxu0 0.0
  %272 = vmatprep.subr.mxu0 0.0
  %273 = vmatpush1.msra.mxu0 0.0
  %274 = vmatprep.subr.mxu0 0.0
  %275 = vmatpush1.msra.mxu0 0.0
  %276 = vmatprep.subr.mxu0 0.0
  %277 = vmatpush1.msra.mxu0 0.0
  %278 = vmatprep.subr.mxu0 0.0
  %279 = vmatpush1.msra.mxu0 0.0
  %280 = vmatprep.subr.mxu0 0.0
  %281 = vmatpush1.msra.mxu0 0.0
  %282 = vmatprep.mubr.f32.mxu0 0.0
  %283 = vmatmul.mubr.f32.gmra.mrb[0].mxu0 %v216
  %v284 = vpop.f32.mrb[0].mxu0
  %v285 = vadd.f32 0.0, %v284
  %v286 = vpop.f32.mrb[0].mxu0
  %287 = vdwg.mxu0
  %v288 = vadd.f32 %v212, %v285
  %v289 = vmul.f32 %v288, 0.5
  %v290 = vtanh.pop %v289
  %v291 = vmul.f32 %v290, 0.5
  %v292 = vadd.f32 %v291, 0.5
  %v293 = vtanh.pop %v288
  %v294 = vmul.f32 %v292, %v205
  %296 = vrot.lane.b32.xlu0 %v293, 32
  %v297 = vpop.permute.xlu0 %296
  %v299 = vmul.f32 %v292, %v297
  %301 = vrot.lane.b32.xlu0 %v299, 32
  %v302 = vpop.permute.xlu0 %301
  %v304 = vadd.f32 %v294, %v302
  %v305 = vtanh.pop %v304
  %307 = vrot.lane.b32.xlu0 %v305, 32
  %v308 = vpop.permute.xlu0 %307
  %v310 = vmul.f32 %v292, %v308
  %v311 = vld [vmem:[%s0 + $0x3] sm:$0x1]
  %313 = vrot.lane.b32.xlu0 %v310, 64
  %v314 = vpop.permute.xlu0 %313
  %v315 = vsel %vm16, %v314, 0
  %317 = vmatprep.subr.mxu0 0.0
  %318 = vmatpush1.msra.mxu0 %v11
  %319 = vmatprep.subr.mxu0 0.0
  %320 = vmatpush1.msra.mxu0 %v12
  %321 = vmatprep.subr.mxu0 0.0
  %322 = vmatpush1.msra.mxu0 %v13
  %323 = vmatprep.subr.mxu0 0.0
  %324 = vmatpush1.msra.mxu0 %v14
  %325 = vmatprep.subr.mxu0 0.0
  %326 = vmatpush1.msra.mxu0 0.0
  %327 = vmatprep.subr.mxu0 0.0
  %328 = vmatpush1.msra.mxu0 0.0
  %329 = vmatprep.subr.mxu0 0.0
  %330 = vmatpush1.msra.mxu0 0.0
  %331 = vmatprep.subr.mxu0 0.0
  %332 = vmatpush1.msra.mxu0 0.0
  %333 = vmatprep.subr.mxu0 0.0
  %334 = vmatpush1.msra.mxu0 0.0
  %335 = vmatprep.subr.mxu0 0.0
  %336 = vmatpush1.msra.mxu0 0.0
  %337 = vmatprep.subr.mxu0 0.0
  %338 = vmatpush1.msra.mxu0 0.0
  %339 = vmatprep.subr.mxu0 0.0
  %340 = vmatpush1.msra.mxu0 0.0
  %341 = vmatprep.subr.mxu0 0.0
  %342 = vmatpush1.msra.mxu0 0.0
  %343 = vmatprep.subr.mxu0 0.0
  %344 = vmatpush1.msra.mxu0 0.0
  %345 = vmatprep.subr.mxu0 0.0
  %346 = vmatpush1.msra.mxu0 0.0
  %347 = vmatprep.subr.mxu0 0.0
  %348 = vmatpush1.msra.mxu0 0.0
  %349 = vmatprep.subr.mxu0 0.0
  %350 = vmatpush1.msra.mxu0 0.0
  %351 = vmatprep.subr.mxu0 0.0
  %352 = vmatpush1.msra.mxu0 0.0
  %353 = vmatprep.subr.mxu0 0.0
  %354 = vmatpush1.msra.mxu0 0.0
  %355 = vmatprep.subr.mxu0 0.0
  %356 = vmatpush1.msra.mxu0 0.0
  %357 = vmatprep.subr.mxu0 0.0
  %358 = vmatpush1.msra.mxu0 0.0
  %359 = vmatprep.subr.mxu0 0.0
  %360 = vmatpush1.msra.mxu0 0.0
  %361 = vmatprep.subr.mxu0 0.0
  %362 = vmatpush1.msra.mxu0 0.0
  %363 = vmatprep.subr.mxu0 0.0
  %364 = vmatpush1.msra.mxu0 0.0
  %365 = vmatprep.subr.mxu0 0.0
  %366 = vmatpush1.msra.mxu0 0.0
  %367 = vmatprep.subr.mxu0 0.0
  %368 = vmatpush1.msra.mxu0 0.0
  %369 = vmatprep.subr.mxu0 0.0
  %370 = vmatpush1.msra.mxu0 0.0
  %371 = vmatprep.subr.mxu0 0.0
  %372 = vmatpush1.msra.mxu0 0.0
  %373 = vmatprep.subr.mxu0 0.0
  %374 = vmatpush1.msra.mxu0 0.0
  %375 = vmatprep.subr.mxu0 0.0
  %376 = vmatpush1.msra.mxu0 0.0
  %377 = vmatprep.subr.mxu0 0.0
  %378 = vmatpush1.msra.mxu0 0.0
  %379 = vmatprep.subr.mxu0 0.0
  %380 = vmatpush1.msra.mxu0 0.0
  %381 = vmatprep.mubr.f32.mxu0 0.0
  %382 = vmatmul.mubr.f32.gmra.mrb[0].mxu0 %v315
  %v383 = vpop.f32.mrb[0].mxu0
  %v384 = vadd.f32 0.0, %v383
  %v385 = vpop.f32.mrb[0].mxu0
  %386 = vdwg.mxu0
  %v387 = vadd.f32 %v311, %v384
  %v388 = vmul.f32 %v387, 0.5
  %v389 = vtanh.pop %v388
  %v390 = vmul.f32 %v389, 0.5
  %v391 = vadd.f32 %v390, 0.5
  %v392 = vtanh.pop %v387
  %v393 = vmul.f32 %v391, %v304
  %395 = vrot.lane.b32.xlu0 %v392, 32
  %v396 = vpop.permute.xlu0 %395
  %v398 = vmul.f32 %v391, %v396
  %400 = vrot.lane.b32.xlu0 %v398, 32
  %v401 = vpop.permute.xlu0 %400
  %v403 = vadd.f32 %v393, %v401
  %v404 = vtanh.pop %v403
  %406 = vrot.lane.b32.xlu0 %v404, 32
  %v407 = vpop.permute.xlu0 %406
  %v409 = vmul.f32 %v391, %v407
  %v410 = vld [vmem:[%s0 + $0x4] sm:$0x1]
  %412 = vrot.lane.b32.xlu0 %v409, 64
  %v413 = vpop.permute.xlu0 %412
  %v414 = vsel %vm16, %v413, 0
  %416 = vmatprep.subr.mxu0 0.0
  %417 = vmatpush1.msra.mxu0 %v11
  %418 = vmatprep.subr.mxu0 0.0
  %419 = vmatpush1.msra.mxu0 %v12
  %420 = vmatprep.subr.mxu0 0.0
  %421 = vmatpush1.msra.mxu0 %v13
  %422 = vmatprep.subr.mxu0 0.0
  %423 = vmatpush1.msra.mxu0 %v14
  %424 = vmatprep.subr.mxu0 0.0
  %425 = vmatpush1.msra.mxu0 0.0
  %426 = vmatprep.subr.mxu0 0.0
  %427 = vmatpush1.msra.mxu0 0.0
  %428 = vmatprep.subr.mxu0 0.0
  %429 = vmatpush1.msra.mxu0 0.0
  %430 = vmatprep.subr.mxu0 0.0
  %431 = vmatpush1.msra.mxu0 0.0
  %432 = vmatprep.subr.mxu0 0.0
  %433 = vmatpush1.msra.mxu0 0.0
  %434 = vmatprep.subr.mxu0 0.0
  %435 = vmatpush1.msra.mxu0 0.0
  %436 = vmatprep.subr.mxu0 0.0
  %437 = vmatpush1.msra.mxu0 0.0
  %438 = vmatprep.subr.mxu0 0.0
  %439 = vmatpush1.msra.mxu0 0.0
  %440 = vmatprep.subr.mxu0 0.0
  %441 = vmatpush1.msra.mxu0 0.0
  %442 = vmatprep.subr.mxu0 0.0
  %443 = vmatpush1.msra.mxu0 0.0
  %444 = vmatprep.subr.mxu0 0.0
  %445 = vmatpush1.msra.mxu0 0.0
  %446 = vmatprep.subr.mxu0 0.0
  %447 = vmatpush1.msra.mxu0 0.0
  %448 = vmatprep.subr.mxu0 0.0
  %449 = vmatpush1.msra.mxu0 0.0
  %450 = vmatprep.subr.mxu0 0.0
  %451 = vmatpush1.msra.mxu0 0.0
  %452 = vmatprep.subr.mxu0 0.0
  %453 = vmatpush1.msra.mxu0 0.0
  %454 = vmatprep.subr.mxu0 0.0
  %455 = vmatpush1.msra.mxu0 0.0
  %456 = vmatprep.subr.mxu0 0.0
  %457 = vmatpush1.msra.mxu0 0.0
  %458 = vmatprep.subr.mxu0 0.0
  %459 = vmatpush1.msra.mxu0 0.0
  %460 = vmatprep.subr.mxu0 0.0
  %461 = vmatpush1.msra.mxu0 0.0
  %462 = vmatprep.subr.mxu0 0.0
  %463 = vmatpush1.msra.mxu0 0.0
  %464 = vmatprep.subr.mxu0 0.0
  %465 = vmatpush1.msra.mxu0 0.0
  %466 = vmatprep.subr.mxu0 0.0
  %467 = vmatpush1.msra.mxu0 0.0
  %468 = vmatprep.subr.mxu0 0.0
  %469 = vmatpush1.msra.mxu0 0.0
  %470 = vmatprep.subr.mxu0 0.0
  %471 = vmatpush1.msra.mxu0 0.0
  %472 = vmatprep.subr.mxu0 0.0
  %473 = vmatpush1.msra.mxu0 0.0
  %474 = vmatprep.subr.mxu0 0.0
  %475 = vmatpush1.msra.mxu0 0.0
  %476 = vmatprep.subr.mxu0 0.0
  %477 = vmatpush1.msra.mxu0 0.0
  %478 = vmatprep.subr.mxu0 0.0
  %479 = vmatpush1.msra.mxu0 0.0
  %480 = vmatprep.mubr.f32.mxu0 0.0
  %481 = vmatmul.mubr.f32.gmra.mrb[0].mxu0 %v414
  %v482 = vpop.f32.mrb[0].mxu0
  %v483 = vadd.f32 0.0, %v482
  %v484 = vpop.f32.mrb[0].mxu0
  %485 = vdwg.mxu0
  %v486 = vadd.f32 %v410, %v483
  %v487 = vmul.f32 %v486, 0.5
  %v488 = vtanh.pop %v487
  %v489 = vmul.f32 %v488, 0.5
  %v490 = vadd.f32 %v489, 0.5
  %v491 = vtanh.pop %v486
  %v492 = vmul.f32 %v490, %v403
  %494 = vrot.lane.b32.xlu0 %v491, 32
  %v495 = vpop.permute.xlu0 %494
  %v497 = vmul.f32 %v490, %v495
  %499 = vrot.lane.b32.xlu0 %v497, 32
  %v500 = vpop.permute.xlu0 %499
  %v502 = vadd.f32 %v492, %v500
  %v503 = vtanh.pop %v502
  %505 = vrot.lane.b32.xlu0 %v503, 32
  %v506 = vpop.permute.xlu0 %505
  %v508 = vmul.f32 %v490, %v506
  %v509 = vld [vmem:[%s0 + $0x5] sm:$0x1]
  %511 = vrot.lane.b32.xlu0 %v508, 64
  %v512 = vpop.permute.xlu0 %511
  %v513 = vsel %vm16, %v512, 0
  %515 = vmatprep.subr.mxu0 0.0
  %516 = vmatpush1.msra.mxu0 %v11
  %517 = vmatprep.subr.mxu0 0.0
  %518 = vmatpush1.msra.mxu0 %v12
  %519 = vmatprep.subr.mxu0 0.0
  %520 = vmatpush1.msra.mxu0 %v13
  %521 = vmatprep.subr.mxu0 0.0
  %522 = vmatpush1.msra.mxu0 %v14
  %523 = vmatprep.subr.mxu0 0.0
  %524 = vmatpush1.msra.mxu0 0.0
  %525 = vmatprep.subr.mxu0 0.0
  %526 = vmatpush1.msra.mxu0 0.0
  %527 = vmatprep.subr.mxu0 0.0
  %528 = vmatpush1.msra.mxu0 0.0
  %529 = vmatprep.subr.mxu0 0.0
  %530 = vmatpush1.msra.mxu0 0.0
  %531 = vmatprep.subr.mxu0 0.0
  %532 = vmatpush1.msra.mxu0 0.0
  %533 = vmatprep.subr.mxu0 0.0
  %534 = vmatpush1.msra.mxu0 0.0
  %535 = vmatprep.subr.mxu0 0.0
  %536 = vmatpush1.msra.mxu0 0.0
  %537 = vmatprep.subr.mxu0 0.0
  %538 = vmatpush1.msra.mxu0 0.0
  %539 = vmatprep.subr.mxu0 0.0
  %540 = vmatpush1.msra.mxu0 0.0
  %541 = vmatprep.subr.mxu0 0.0
  %542 = vmatpush1.msra.mxu0 0.0
  %543 = vmatprep.subr.mxu0 0.0
  %544 = vmatpush1.msra.mxu0 0.0
  %545 = vmatprep.subr.mxu0 0.0
  %546 = vmatpush1.msra.mxu0 0.0
  %547 = vmatprep.subr.mxu0 0.0
  %548 = vmatpush1.msra.mxu0 0.0
  %549 = vmatprep.subr.mxu0 0.0
  %550 = vmatpush1.msra.mxu0 0.0
  %551 = vmatprep.subr.mxu0 0.0
  %552 = vmatpush1.msra.mxu0 0.0
  %553 = vmatprep.subr.mxu0 0.0
  %554 = vmatpush1.msra.mxu0 0.0
  %555 = vmatprep.subr.mxu0 0.0
  %556 = vmatpush1.msra.mxu0 0.0
  %557 = vmatprep.subr.mxu0 0.0
  %558 = vmatpush1.msra.mxu0 0.0
  %559 = vmatprep.subr.mxu0 0.0
  %560 = vmatpush1.msra.mxu0 0.0
  %561 = vmatprep.subr.mxu0 0.0
  %562 = vmatpush1.msra.mxu0 0.0
  %563 = vmatprep.subr.mxu0 0.0
  %564 = vmatpush1.msra.mxu0 0.0
  %565 = vmatprep.subr.mxu0 0.0
  %566 = vmatpush1.msra.mxu0 0.0
  %567 = vmatprep.subr.mxu0 0.0
  %568 = vmatpush1.msra.mxu0 0.0
  %569 = vmatprep.subr.mxu0 0.0
  %570 = vmatpush1.msra.mxu0 0.0
  %571 = vmatprep.subr.mxu0 0.0
  %572 = vmatpush1.msra.mxu0 0.0
  %573 = vmatprep.subr.mxu0 0.0
  %574 = vmatpush1.msra.mxu0 0.0
  %575 = vmatprep.subr.mxu0 0.0
  %576 = vmatpush1.msra.mxu0 0.0
  %577 = vmatprep.subr.mxu0 0.0
  %578 = vmatpush1.msra.mxu0 0.0
  %579 = vmatprep.mubr.f32.mxu0 0.0
  %580 = vmatmul.mubr.f32.gmra.mrb[0].mxu0 %v513
  %v581 = vpop.f32.mrb[0].mxu0
  %v582 = vadd.f32 0.0, %v581
  %v583 = vpop.f32.mrb[0].mxu0
  %584 = vdwg.mxu0
  %v585 = vadd.f32 %v509, %v582
  %v586 = vmul.f32 %v585, 0.5
  %v587 = vtanh.pop %v586
  %v588 = vmul.f32 %v587, 0.5
  %v589 = vadd.f32 %v588, 0.5
  %v590 = vtanh.pop %v585
  %v591 = vmul.f32 %v589, %v502
  %593 = vrot.lane.b32.xlu0 %v590, 32
  %v594 = vpop.permute.xlu0 %593
  %v596 = vmul.f32 %v589, %v594
  %598 = vrot.lane.b32.xlu0 %v596, 32
  %v599 = vpop.permute.xlu0 %598
  %v601 = vadd.f32 %v591, %v599
  %v602 = vtanh.pop %v601
  %604 = vrot.lane.b32.xlu0 %v602, 32
  %v605 = vpop.permute.xlu0 %604
  %v607 = vmul.f32 %v589, %v605
  %v608 = vld [vmem:[%s0 + $0x6] sm:$0x1]
  %610 = vrot.lane.b32.xlu0 %v607, 64
  %v611 = vpop.permute.xlu0 %610
  %v612 = vsel %vm16, %v611, 0
  %614 = vmatprep.subr.mxu0 0.0
  %615 = vmatpush1.msra.mxu0 %v11
  %616 = vmatprep.subr.mxu0 0.0
  %617 = vmatpush1.msra.mxu0 %v12
  %618 = vmatprep.subr.mxu0 0.0
  %619 = vmatpush1.msra.mxu0 %v13
  %620 = vmatprep.subr.mxu0 0.0
  %621 = vmatpush1.msra.mxu0 %v14
  %622 = vmatprep.subr.mxu0 0.0
  %623 = vmatpush1.msra.mxu0 0.0
  %624 = vmatprep.subr.mxu0 0.0
  %625 = vmatpush1.msra.mxu0 0.0
  %626 = vmatprep.subr.mxu0 0.0
  %627 = vmatpush1.msra.mxu0 0.0
  %628 = vmatprep.subr.mxu0 0.0
  %629 = vmatpush1.msra.mxu0 0.0
  %630 = vmatprep.subr.mxu0 0.0
  %631 = vmatpush1.msra.mxu0 0.0
  %632 = vmatprep.subr.mxu0 0.0
  %633 = vmatpush1.msra.mxu0 0.0
  %634 = vmatprep.subr.mxu0 0.0
  %635 = vmatpush1.msra.mxu0 0.0
  %636 = vmatprep.subr.mxu0 0.0
  %637 = vmatpush1.msra.mxu0 0.0
  %638 = vmatprep.subr.mxu0 0.0
  %639 = vmatpush1.msra.mxu0 0.0
  %640 = vmatprep.subr.mxu0 0.0
  %641 = vmatpush1.msra.mxu0 0.0
  %642 = vmatprep.subr.mxu0 0.0
  %643 = vmatpush1.msra.mxu0 0.0
  %644 = vmatprep.subr.mxu0 0.0
  %645 = vmatpush1.msra.mxu0 0.0
  %646 = vmatprep.subr.mxu0 0.0
  %647 = vmatpush1.msra.mxu0 0.0
  %648 = vmatprep.subr.mxu0 0.0
  %649 = vmatpush1.msra.mxu0 0.0
  %650 = vmatprep.subr.mxu0 0.0
  %651 = vmatpush1.msra.mxu0 0.0
  %652 = vmatprep.subr.mxu0 0.0
  %653 = vmatpush1.msra.mxu0 0.0
  %654 = vmatprep.subr.mxu0 0.0
  %655 = vmatpush1.msra.mxu0 0.0
  %656 = vmatprep.subr.mxu0 0.0
  %657 = vmatpush1.msra.mxu0 0.0
  %658 = vmatprep.subr.mxu0 0.0
  %659 = vmatpush1.msra.mxu0 0.0
  %660 = vmatprep.subr.mxu0 0.0
  %661 = vmatpush1.msra.mxu0 0.0
  %662 = vmatprep.subr.mxu0 0.0
  %663 = vmatpush1.msra.mxu0 0.0
  %664 = vmatprep.subr.mxu0 0.0
  %665 = vmatpush1.msra.mxu0 0.0
  %666 = vmatprep.subr.mxu0 0.0
  %667 = vmatpush1.msra.mxu0 0.0
  %668 = vmatprep.subr.mxu0 0.0
  %669 = vmatpush1.msra.mxu0 0.0
  %670 = vmatprep.subr.mxu0 0.0
  %671 = vmatpush1.msra.mxu0 0.0
  %672 = vmatprep.subr.mxu0 0.0
  %673 = vmatpush1.msra.mxu0 0.0
  %674 = vmatprep.subr.mxu0 0.0
  %675 = vmatpush1.msra.mxu0 0.0
  %676 = vmatprep.subr.mxu0 0.0
  %677 = vmatpush1.msra.mxu0 0.0
  %678 = vmatprep.mubr.f32.mxu0 0.0
  %679 = vmatmul.mubr.f32.gmra.mrb[0].mxu0 %v612
  %v680 = vpop.f32.mrb[0].mxu0
  %v681 = vadd.f32 0.0, %v680
  %v682 = vpop.f32.mrb[0].mxu0
  %683 = vdwg.mxu0
  %v684 = vadd.f32 %v608, %v681
  %v685 = vmul.f32 %v684, 0.5
  %v686 = vtanh.pop %v685
  %v687 = vmul.f32 %v686, 0.5
  %v688 = vadd.f32 %v687, 0.5
  %v689 = vtanh.pop %v684
  %v690 = vmul.f32 %v688, %v601
  %692 = vrot.lane.b32.xlu0 %v689, 32
  %v693 = vpop.permute.xlu0 %692
  %v695 = vmul.f32 %v688, %v693
  %697 = vrot.lane.b32.xlu0 %v695, 32
  %v698 = vpop.permute.xlu0 %697
  %v700 = vadd.f32 %v690, %v698
  %v701 = vtanh.pop %v700
  %703 = vrot.lane.b32.xlu0 %v701, 32
  %v704 = vpop.permute.xlu0 %703
  %v706 = vmul.f32 %v688, %v704
  %v707 = vld [vmem:[%s0 + $0x7] sm:$0x1]
  %709 = vrot.lane.b32.xlu0 %v706, 64
  %v710 = vpop.permute.xlu0 %709
  %v711 = vsel %vm16, %v710, 0
  %713 = vmatprep.subr.mxu0 0.0
  %714 = vmatpush1.msra.mxu0 %v11
  %715 = vmatprep.subr.mxu0 0.0
  %716 = vmatpush1.msra.mxu0 %v12
  %717 = vmatprep.subr.mxu0 0.0
  %718 = vmatpush1.msra.mxu0 %v13
  %719 = vmatprep.subr.mxu0 0.0
  %720 = vmatpush1.msra.mxu0 %v14
  %721 = vmatprep.subr.mxu0 0.0
  %722 = vmatpush1.msra.mxu0 0.0
  %723 = vmatprep.subr.mxu0 0.0
  %724 = vmatpush1.msra.mxu0 0.0
  %725 = vmatprep.subr.mxu0 0.0
  %726 = vmatpush1.msra.mxu0 0.0
  %727 = vmatprep.subr.mxu0 0.0
  %728 = vmatpush1.msra.mxu0 0.0
  %729 = vmatprep.subr.mxu0 0.0
  %730 = vmatpush1.msra.mxu0 0.0
  %731 = vmatprep.subr.mxu0 0.0
  %732 = vmatpush1.msra.mxu0 0.0
  %733 = vmatprep.subr.mxu0 0.0
  %734 = vmatpush1.msra.mxu0 0.0
  %735 = vmatprep.subr.mxu0 0.0
  %736 = vmatpush1.msra.mxu0 0.0
  %737 = vmatprep.subr.mxu0 0.0
  %738 = vmatpush1.msra.mxu0 0.0
  %739 = vmatprep.subr.mxu0 0.0
  %740 = vmatpush1.msra.mxu0 0.0
  %741 = vmatprep.subr.mxu0 0.0
  %742 = vmatpush1.msra.mxu0 0.0
  %743 = vmatprep.subr.mxu0 0.0
  %744 = vmatpush1.msra.mxu0 0.0
  %745 = vmatprep.subr.mxu0 0.0
  %746 = vmatpush1.msra.mxu0 0.0
  %747 = vmatprep.subr.mxu0 0.0
  %748 = vmatpush1.msra.mxu0 0.0
  %749 = vmatprep.subr.mxu0 0.0
  %750 = vmatpush1.msra.mxu0 0.0
  %751 = vmatprep.subr.mxu0 0.0
  %752 = vmatpush1.msra.mxu0 0.0
  %753 = vmatprep.subr.mxu0 0.0
  %754 = vmatpush1.msra.mxu0 0.0
  %755 = vmatprep.subr.mxu0 0.0
  %756 = vmatpush1.msra.mxu0 0.0
  %757 = vmatprep.subr.mxu0 0.0
  %758 = vmatpush1.msra.mxu0 0.0
  %759 = vmatprep.subr.mxu0 0.0
  %760 = vmatpush1.msra.mxu0 0.0
  %761 = vmatprep.subr.mxu0 0.0
  %762 = vmatpush1.msra.mxu0 0.0
  %763 = vmatprep.subr.mxu0 0.0
  %764 = vmatpush1.msra.mxu0 0.0
  %765 = vmatprep.subr.mxu0 0.0
  %766 = vmatpush1.msra.mxu0 0.0
  %767 = vmatprep.subr.mxu0 0.0
  %768 = vmatpush1.msra.mxu0 0.0
  %769 = vmatprep.subr.mxu0 0.0
  %770 = vmatpush1.msra.mxu0 0.0
  %771 = vmatprep.subr.mxu0 0.0
  %772 = vmatpush1.msra.mxu0 0.0
  %773 = vmatprep.subr.mxu0 0.0
  %774 = vmatpush1.msra.mxu0 0.0
  %775 = vmatprep.subr.mxu0 0.0
  %776 = vmatpush1.msra.mxu0 0.0
  %777 = vmatprep.mubr.f32.mxu0 0.0
  %778 = vmatmul.mubr.f32.gmra.mrb[0].mxu0 %v711
  %v779 = vpop.f32.mrb[0].mxu0
  %v780 = vadd.f32 0.0, %v779
  %v781 = vpop.f32.mrb[0].mxu0
  %782 = vdwg.mxu0
  %v783 = vadd.f32 %v707, %v780
  %v784 = vmul.f32 %v783, 0.5
  %v785 = vtanh.pop %v784
  %v786 = vmul.f32 %v785, 0.5
  %v787 = vadd.f32 %v786, 0.5
  %v788 = vtanh.pop %v783
  %v789 = vmul.f32 %v787, %v700
  %791 = vrot.lane.b32.xlu0 %v788, 32
  %v792 = vpop.permute.xlu0 %791
  %v794 = vmul.f32 %v787, %v792
  %796 = vrot.lane.b32.xlu0 %v794, 32
  %v797 = vpop.permute.xlu0 %796
  %v799 = vadd.f32 %v789, %v797
  %v800 = vtanh.pop %v799
  %802 = vrot.lane.b32.xlu0 %v800, 32
  %v803 = vpop.permute.xlu0 %802
  %v805 = vmul.f32 %v787, %v803
  %v806 = vrot.slane %v211, 7
  %v808 = vrot.slane %v310, 6
  %v810 = vrot.slane %v409, 5
  %v812 = vrot.slane %v508, 4
  %v814 = vrot.slane %v607, 3
  %v816 = vrot.slane %v706, 2
  %v819 = vrot.slane %v805, 1
  %vm821 = vcmask 1040384
  %v822 = vsel %vm821, %v112, %v806
  %vm823 = vcmask 1041408
  %v824 = vsel %vm823, %v822, %v808
  %vm825 = vcmask 1042432
  %v826 = vsel %vm825, %v824, %v810
  %vm827 = vcmask 1043456
  %v828 = vsel %vm827, %v826, %v812
  %vm829 = vcmask 1044480
  %v830 = vsel %vm829, %v828, %v814
  %vm831 = vcmask 1045504
  %v832 = vsel %vm831, %v830, %v816
  %vm833 = vcmask 1046528
  %v834 = vsel %vm833, %v832, %v819
  %836 = vrot.lane.b32.xlu0 %v834, 64
  %v837 = vpop.permute.xlu0 %836
  %839 = vst.msk [vmem:[%s2] sm:$0xff] %vm16, %v837
  // Predicated region
  $region10: #{lstm_model_forward.1} parent=0 // pred_check
    _
  $region11: #{lstm_model_forward.1} parent=0 // pred_check_branch
    %841 = sbr.rel (0) target = $region13
  $region12: #{lstm_model_forward.1} parent=0 // pred_region
    _
  $region13: #{lstm_model_forward.1} parent=0 // pred_fallthru
    _
  // Predicated region
  $region14: #{lstm_model_forward.1} parent=0 // pred_check
    _
  $region15: #{lstm_model_forward.1} parent=0 // pred_check_branch
    %843 = sbr.rel (0) target = $region17
  $region16: #{lstm_model_forward.1} parent=0 // pred_region
    _
  $region17: #{lstm_model_forward.1} parent=0 // pred_fallthru
    _

</llo_original>
